<compile_context>
chip_gen: v5e
topology: v5e:2x2
jax: 0.10.0
libtpu: 0.0.40
codegen_flags: <defaults>
</compile_context>

<pallas_src>
import jax
import jax.numpy as jnp
from jax.experimental import pallas as pl
from jax.experimental.pallas import tpu as pltpu


def _hsilu_kernel(x_ref, o_ref):
    # hardsigmoid(x) = clamp(x/6 + 1/2, 0, 1)   (PyTorch semantics)
    x = x_ref[...].astype(jnp.float32)
    hs = jnp.clip(x * (1.0 / 6.0) + 0.5, 0.0, 1.0)
    o_ref[...] = (x * hs).astype(o_ref.dtype)


_LANE_CANDIDATES = (8192, 4096, 2048, 1024, 512, 256, 128)
_TARGET_BLOCK_BYTES = 1 << 20  # ~1 MiB per block (safe on v5e/v6e/v7x VMEM)


def hsilu(x: jax.Array) -> jax.Array:
    """Elementwise x * hardsigmoid(x). Works for any shape / float dtype."""
    orig_shape = x.shape
    dtype = x.dtype
    itemsize = jnp.dtype(dtype).itemsize
    # Sublane packing: 8 rows for 4-byte, 16 for 2-byte, 32 for 1-byte dtypes.
    packing = max(8, 32 // itemsize)

    flat = x.reshape(-1)
    n = flat.shape[0]

    # Pick the widest lane width that divides n -> wide, unmasked stores and
    # no full-tensor pad/copy pass.
    lane = None
    for cand in _LANE_CANDIDATES:
        if n % cand == 0:
            lane = cand
            break

    padded = False
    if lane is None:
        # Fallback: pad only the final sub-1024 tail. hsilu(0) == 0, so padded
        # zeros are harmless and sliced off afterwards.
        lane = 1024
        n_pad = pl.cdiv(n, lane) * lane
        flat = jnp.pad(flat, (0, n_pad - n))
        padded = True
    else:
        n_pad = n

    rows = n_pad // lane
    x2d = flat.reshape(rows, lane)

    # Row-block sizing: target ~1 MiB per block, aligned to sublane packing.
    target_rows = max(packing, _TARGET_BLOCK_BYTES // (lane * itemsize))
    target_rows = (target_rows // packing) * packing
    if rows <= target_rows:
        block_rows = rows            # full-dim block is always layout-legal
        grid = (1,)
    else:
        block_rows = target_rows
        grid = (pl.cdiv(rows, block_rows),)   # ragged edge masked by Pallas

    out2d = pl.pallas_call(
        _hsilu_kernel,
        out_shape=jax.ShapeDtypeStruct((rows, lane), dtype),
        grid=grid,
        in_specs=[pl.BlockSpec((block_rows, lane), lambda i: (i, 0))],
        out_specs=pl.BlockSpec((block_rows, lane), lambda i: (i, 0)),
        compiler_params=pltpu.CompilerParams(
            dimension_semantics=("parallel",)),
        cost_estimate=pl.CostEstimate(
            flops=4 * n_pad,
            transcendentals=0,
            bytes_accessed=2 * n_pad * itemsize),
    )(x2d)

    out = out2d.reshape(-1)
    if padded:
        out = out[:n]
    return out.reshape(orig_shape)


def hsilu_ref(x: jax.Array) -> jax.Array:
    hs = jnp.clip(x.astype(jnp.float32) / 6.0 + 0.5, 0.0, 1.0)
    return (x.astype(jnp.float32) * hs).astype(x.dtype)


if __name__ == "__main__":
    key = jax.random.PRNGKey(0)

    # NCHW input, matching the PyTorch module's typical usage.
    x = jax.random.normal(key, (2, 4, 16, 16), dtype=jnp.float32) * 4.0
    out = jax.block_until_ready(hsilu(x))
    ref = hsilu_ref(x)
    assert out.shape == x.shape and out.dtype == x.dtype
    assert jnp.allclose(out, ref, atol=1e-6, rtol=1e-6), float(
        jnp.max(jnp.abs(out - ref)))

    # Unaligned size -> exercises the small tail-pad fallback path.
    key2 = jax.random.PRNGKey(0)
    y = jax.random.normal(key2, (3, 5, 7, 11), dtype=jnp.float32) * 4.0
    out_y = jax.block_until_ready(hsilu(y))
    ref_y = hsilu_ref(y)
    assert out_y.shape == y.shape and out_y.dtype == y.dtype
    assert jnp.allclose(out_y, ref_y, atol=1e-6, rtol=1e-6), float(
        jnp.max(jnp.abs(out_y - ref_y)))

    print("KERNEL_OK")
</pallas_src>

<mosaic_0001>
module attributes {stable_mosaic.version = 11 : i64} {
  func.func @_hsilu_kernel(%arg0: i32, %arg1: memref<1x2048xf32, #tpu.memory_space<vmem>>, %arg2: memref<1x2048xf32, #tpu.memory_space<vmem>>) attributes {dimension_semantics = [#tpu.dimension_semantics<parallel>], iteration_bounds = array<i64: 1>, scalar_prefetch = 0 : i64, scratch_operands = 0 : i64, tpu.core_type = #tpu.core_type<tc>, window_params = [{transform_indices = @transform_0, window_bounds = array<i64: 1, 2048>}, {transform_indices = @transform_1, window_bounds = array<i64: 1, 2048>}]} {
    %c0 = arith.constant 0 : index
    %c0_0 = arith.constant 0 : index
    %0 = vector.load %arg1[%c0, %c0_0] : memref<1x2048xf32, #tpu.memory_space<vmem>>, vector<1x2048xf32>
    %cst = arith.constant 0.166666672 : f32
    %1 = vector.broadcast %cst : f32 to vector<1x2048xf32>
    %2 = arith.mulf %0, %1 : vector<1x2048xf32>
    %cst_1 = arith.constant 5.000000e-01 : f32
    %3 = vector.broadcast %cst_1 : f32 to vector<1x2048xf32>
    %4 = arith.addf %2, %3 : vector<1x2048xf32>
    %cst_2 = arith.constant 0.000000e+00 : f32
    %cst_3 = arith.constant 1.000000e+00 : f32
    %5 = vector.broadcast %cst_2 : f32 to vector<1x2048xf32>
    %6 = arith.maximumf %5, %4 : vector<1x2048xf32>
    %7 = vector.broadcast %cst_3 : f32 to vector<1x2048xf32>
    %8 = arith.minimumf %7, %6 : vector<1x2048xf32>
    %9 = arith.mulf %0, %8 : vector<1x2048xf32>
    %c0_4 = arith.constant 0 : index
    %c0_5 = arith.constant 0 : index
    %10 = vector.load %arg2[%c0_4, %c0_5] : memref<1x2048xf32, #tpu.memory_space<vmem>>, vector<1x2048xf32>
    tpu.vector_store %arg2[%c0_4, %c0_5], %9 {strides = array<i32>} : memref<1x2048xf32, #tpu.memory_space<vmem>>, vector<1x2048xf32>,
    return
  }
  func.func @transform_0(%arg0: i32) -> (i32, i32) {
    %c0_i32 = arith.constant 0 : i32
    %c0_i32_0 = arith.constant 0 : i32
    return %arg0, %c0_i32 : i32, i32
  }
  func.func @transform_1(%arg0: i32) -> (i32, i32) {
    %c0_i32 = arith.constant 0 : i32
    %c0_i32_0 = arith.constant 0 : i32
    return %arg0, %c0_i32 : i32, i32
  }
}

</mosaic_0001>

<llo_original>
// kernel: tpu_custom_call.1
$region0: #{tpu_custom_call.1}
  #allocation0 [shape = 'u32[]', space=smem, size = 0x4, offset = 0x4, fixed_abs, tag = 'smem constant byte address 0x4 - core index']
  #allocation1 [shape = 'u32[72,128]{1,0:T(1,128)}', space=vmem, size = 0x9000, scoped, tag = 'internal scratch']
  %s0 = inlined_call_operand.hbm [shape: f32[1,2048], index: 0, kind: input, shape index: {}]
  %s1 = inlined_call_operand.hbm [shape: f32[1,2048], index: 1, kind: output, shape index: {}]
  %s2 = sld [smem:[#allocation0]]
  $region18: #{tpu_custom_call.1} parent=0
    _
  %s4 = ssub.s32 1, %s2
  %s5 = scalar_select 0, %s4, %s2
  $region1: #{tpu_custom_call.1} parent=0
    #allocation2 [shape = 'u8[8192]{0}', space=vmem, size = 0x2000, scoped, tag = 'input window, operand 0, single buffered']
    #allocation3 [shape = 's32[1]{0}', space=sflag, size = 0x4, scoped, tag = 'scoped memory for tpu_custom_call.1']
    #allocation4 [shape = 's32[1]{0}', space=sflag, size = 0x4, scoped, tag = 'scoped memory for tpu_custom_call.1']
    #allocation5 [shape = 'u8[8192]{0}', space=vmem, size = 0x2000, scoped, tag = 'output window, operand 0, single buffered']
    %6 = vsyncpa [#allocation3], 0
    %7 = vsyncpa [#allocation4], 0
    // Predicated region
    $region2: #{tpu_custom_call.1} parent=1 // pred_check
      _
    $region3: #{tpu_custom_call.1} parent=1 // pred_check_branch
      %9 = sbr.rel (0) target = $region5
    $region4: #{tpu_custom_call.1} parent=1 // pred_region
      %11 = vsyncadd [#allocation3], 0
      %s13 = sshll.u32 %s0, 4
      %s14 = int_to_ptr.hbm [resolvable:$true] %s13
      %s15 = sshll.u32 [#allocation2], 4
      %s16 = int_to_ptr.vmem [resolvable:$true] %s15
      %18 = dma.hbm_to_vmem [thread:$0]  %s14, 256, %s16, [#allocation3]
    $region5: #{tpu_custom_call.1} parent=1 // pred_fallthru
      _
    // Predicated region
    $region6: #{tpu_custom_call.1} parent=1 // pred_check
      _
    $region7: #{tpu_custom_call.1} parent=1 // pred_check_branch
      %20 = sbr.rel (0) target = $region9
    $region8: #{tpu_custom_call.1} parent=1 // pred_region
      %22 = dma.done [#allocation3], 256
    $region9: #{tpu_custom_call.1} parent=1 // pred_fallthru
      _
    %v23 = vld [vmem:[#allocation2] sm:$0xff]
    %v24 = vld [vmem:[#allocation2 + $0x8] sm:$0xff]
    %v25 = vmul.f32 %v23, 0.16666667
    %v26 = vmul.f32 %v24, 0.16666667
    %v27 = vadd.f32 %v25, 0.5
    %v28 = vadd.f32 %v26, 0.5
    %v29 = vmax.f32 %v27, 0.0
    %v30 = vmax.f32 %v28, 0.0
    %v31 = vmin.f32 %v29, 1.0
    %v32 = vmin.f32 %v30, 1.0
    %v33 = vmul.f32 %v23, %v31
    %v34 = vmul.f32 %v24, %v32
    %35 = vst [vmem:[#allocation5] sm:$0xff] %v33
    %36 = vst [vmem:[#allocation5 + $0x8] sm:$0xff] %v34
    // Predicated region
    $region10: #{tpu_custom_call.1} parent=1 // pred_check
      _
    $region11: #{tpu_custom_call.1} parent=1 // pred_check_branch
      %38 = sbr.rel (0) target = $region13
    $region12: #{tpu_custom_call.1} parent=1 // pred_region
      %40 = vsyncadd [#allocation4], 0
      %s42 = sshll.u32 [#allocation5], 4
      %s43 = int_to_ptr.vmem [resolvable:$true] %s42
      %s44 = sshll.u32 %s1, 4
      %s45 = int_to_ptr.hbm [resolvable:$true] %s44
      %47 = dma.vmem_to_hbm [thread:$0]  %s43, 256, %s45, [#allocation4]
    $region13: #{tpu_custom_call.1} parent=1 // pred_fallthru
      _
    // Predicated region
    $region14: #{tpu_custom_call.1} parent=1 // pred_check
      _
    $region15: #{tpu_custom_call.1} parent=1 // pred_check_branch
      %49 = sbr.rel (0) target = $region17
    $region16: #{tpu_custom_call.1} parent=1 // pred_region
      %51 = dma.done [#allocation4], 256
    $region17: #{tpu_custom_call.1} parent=1 // pred_fallthru
      _
    %52 = vsyncpa [#allocation3], 1
    %53 = vsyncpa [#allocation4], 1

</llo_original>
